<compile_context>
chip_gen: v7x
topology: tpu7x:2x2x1
jax: 0.10.0
libtpu: 0.0.40
codegen_flags: <defaults>
</compile_context>

<pallas_src>
import jax
import jax.numpy as jnp
from jax.experimental import pallas as pl
from jax.experimental.pallas import tpu as pltpu

_LANE = 128


def _make_kernel(nc_g, nc_x, bblk):
    c_b = nc_g + nc_x          # column of (bg + bx)
    c_wa = c_b + 1             # column of Wa
    c_ba = c_b + 2             # column of ba (broadcast over rows)

    def kernel(g_ref, x_ref, w_ref, o_ref):
        # g_ref: (bblk, nc_g, TN)   x_ref / o_ref: (bblk, nc_x, TN)
        # w_ref: (nc_hidden, nc_g + nc_x + 3) packed [Wg^T | Wx^T | bg+bx | Wa | ba]
        wg = w_ref[:, 0:nc_g]             # (nc_hidden, nc_g)
        wx = w_ref[:, nc_g:c_b]           # (nc_hidden, nc_x)
        b = w_ref[:, c_b:c_b + 1]         # (nc_hidden, 1)  == bg + bx
        wa = w_ref[:, c_wa:c_wa + 1]      # (nc_hidden, 1)
        ba = w_ref[0:1, c_ba:c_ba + 1]    # (1, 1)

        # Short static unroll over the (capped) batch block; each iteration is
        # two tiny-K matmuls plus VPU/EUP work on lane-dense (C, TN) tiles.
        for bi in range(bblk):
            g = g_ref[bi]                 # (nc_g, TN)
            x = x_ref[bi]                 # (nc_x, TN)

            # Two 1x1 convs as channel-major matmuls; fused bias + ReLU.
            g_c = jnp.dot(wg, g, preferred_element_type=jnp.float32)
            x_c = jnp.dot(wx, x, preferred_element_type=jnp.float32)
            comb = jnp.maximum(g_c + x_c + b, 0.0)            # (nc_hidden, TN)

            # Width-1 attention projection as multiply + sublane reduce
            # (no MXU push for a 1-lane-wide result).
            logits = jnp.sum(comb * wa, axis=0, keepdims=True) + ba
            alpha = jax.nn.sigmoid(logits)                    # (1, TN) f32

            # Gate in the native dtype: cast the small alpha, not the big x.
            o_ref[bi] = x * alpha.astype(x.dtype)

    return kernel


def _choose_tiles(B, HW, nc_g, nc_x, nc_hidden, itemsize, tile_n,
                  max_batch_block, vmem_budget):
    """Pick (batch block, lane tile) sized against a VMEM budget."""
    # Lane (spatial) tile: as large as possible, multiple of 128 (or the full
    # extent when HW < 128 -- full-dim blocks are exempt from the 128 rule).
    if HW <= _LANE:
        tn = HW
    else:
        tn = max(_LANE, (min(tile_n, HW) // _LANE) * _LANE)

    def per_batch_bytes(t):
        io = 2 * (nc_g + 2 * nc_x) * t * itemsize   # double-buffered g/x/out tiles
        mid = 3 * nc_hidden * t * 4                 # g_c / x_c / comb f32 intermediates
        return io + mid

    # Shrink the lane tile until a single batch-row tile fits the budget.
    while tn > _LANE and per_batch_bytes(tn) > vmem_budget:
        tn = max(_LANE, ((tn // 2) // _LANE) * _LANE)

    n_sp = pl.cdiv(HW, tn)

    # Batch block: fill the remaining VMEM budget, capped to bound the unroll.
    bblk = int(max(1, min(B, max_batch_block,
                          vmem_budget // per_batch_bytes(tn))))

    # Keep >= 2 (ideally 4) grid steps so both v7x TensorCores get work.
    target = min(4, B * n_sp)
    while bblk > 1 and pl.cdiv(B, bblk) * n_sp < target:
        bblk = max(1, bblk // 2)

    # If the whole problem still fits in one step, split the spatial axis.
    while pl.cdiv(B, bblk) * pl.cdiv(HW, tn) < 2 and tn > _LANE:
        tn = max(_LANE, ((tn // 2 + _LANE - 1) // _LANE) * _LANE)

    return bblk, tn


def attention_gate(g, x, params, *, tile_n=16384, max_batch_block=8,
                   vmem_budget_bytes=20 * 1024 * 1024):
    """g: (B, nc_g, H, W) NCHW, x: (B, nc_x, H, W) NCHW.  Returns (B, nc_x, H, W)."""
    B, nc_g, H, W = g.shape
    _, nc_x, _, _ = x.shape
    HW = H * W
    nc_hidden = params["wg"].shape[1]
    itemsize = jnp.dtype(x.dtype).itemsize

    bblk, tn = _choose_tiles(B, HW, nc_g, nc_x, nc_hidden, itemsize,
                             tile_n, max_batch_block, vmem_budget_bytes)

    # Free reshapes: NCHW -> (B, C, H*W); the spatial axis becomes the lane dim.
    g3 = g.reshape(B, nc_g, HW)
    x3 = x.reshape(B, nc_x, HW)

    # One packed f32 parameter slab: [Wg^T | Wx^T | bg+bx | Wa | ba].
    w_slab = jnp.concatenate([
        params["wg"].T.astype(jnp.float32),                                   # (nc_hidden, nc_g)
        params["wx"].T.astype(jnp.float32),                                   # (nc_hidden, nc_x)
        (params["bg"] + params["bx"]).reshape(nc_hidden, 1).astype(jnp.float32),
        params["wa"].reshape(nc_hidden, 1).astype(jnp.float32),
        jnp.broadcast_to(params["ba"].reshape(1, 1).astype(jnp.float32),
                         (nc_hidden, 1)),
    ], axis=1)
    P = nc_g + nc_x + 3

    grid = (pl.cdiv(B, bblk), pl.cdiv(HW, tn))

    n_pix = B * HW
    cost = pl.CostEstimate(
        flops=(2 * n_pix * nc_hidden * (nc_g + nc_x)     # two 1x1 convs
               + 2 * n_pix * nc_hidden                    # alpha reduce
               + n_pix * (2 * nc_hidden + nc_x + 2)),     # bias/relu/gate
        transcendentals=n_pix,                            # sigmoid
        bytes_accessed=itemsize * n_pix * (nc_g + 2 * nc_x) + 4 * nc_hidden * P,
    )

    kernel = _make_kernel(nc_g, nc_x, bblk)

    out3 = pl.pallas_call(
        kernel,
        out_shape=jax.ShapeDtypeStruct((B, nc_x, HW), x.dtype),
        grid_spec=pltpu.PrefetchScalarGridSpec(
            num_scalar_prefetch=0,
            grid=grid,
            in_specs=[
                pl.BlockSpec((bblk, nc_g, tn), lambda bi, j: (bi, 0, j)),  # g tile
                pl.BlockSpec((bblk, nc_x, tn), lambda bi, j: (bi, 0, j)),  # x tile
                pl.BlockSpec((nc_hidden, P), lambda bi, j: (0, 0)),        # params
            ],
            out_specs=pl.BlockSpec((bblk, nc_x, tn), lambda bi, j: (bi, 0, j)),
        ),
        compiler_params=pltpu.CompilerParams(
            dimension_semantics=("parallel", "parallel"),
            vmem_limit_bytes=32 * 1024 * 1024),
        cost_estimate=cost,
    )(g3, x3, w_slab)

    return out3.reshape(B, nc_x, H, W)


def init_params(key, nc_g, nc_x, nc_hidden):
    """Deterministic synthetic init (kaiming-ish scaling); biases zero like PyTorch init_weight."""
    k1, k2, k3 = jax.random.split(key, 3)
    wg = jax.random.normal(k1, (nc_g, nc_hidden), jnp.float32) * (2.0 / nc_g) ** 0.5
    wx = jax.random.normal(k2, (nc_x, nc_hidden), jnp.float32) * (2.0 / nc_x) ** 0.5
    wa = jax.random.normal(k3, (nc_hidden, 1), jnp.float32) * (2.0 / nc_hidden) ** 0.5
    return dict(
        wg=wg, bg=jnp.zeros((nc_hidden,), jnp.float32),
        wx=wx, bx=jnp.zeros((nc_hidden,), jnp.float32),
        wa=wa, ba=jnp.zeros((1,), jnp.float32),
    )


def _reference(g, x, params):
    """Pure-JAX reference of the PyTorch forward (NCHW, 1x1 convs as einsums)."""
    wg, bg, wx, bx, wa, ba = (params["wg"], params["bg"], params["wx"],
                              params["bx"], params["wa"], params["ba"])
    g_c = jnp.einsum("bchw,cd->bdhw", g, wg) + bg[None, :, None, None]
    x_c = jnp.einsum("bchw,cd->bdhw", x, wx) + bx[None, :, None, None]
    comb = jnp.maximum(g_c + x_c, 0.0)
    alpha = jax.nn.sigmoid(
        jnp.einsum("bdhw,do->bohw", comb, wa) + ba[None, :, None, None])
    return alpha * x   # alpha (B,1,H,W) broadcasts == .repeat(1, nc_x, 1, 1)


if __name__ == "__main__":
    B, nc_g, nc_x, nc_hidden, H, W = 2, 4, 4, 32, 16, 16   # H*W = 256 per batch

    key = jax.random.PRNGKey(0)
    kg, kx, kp = jax.random.split(key, 3)
    g = jax.random.normal(kg, (B, nc_g, H, W), jnp.float32)
    x = jax.random.normal(kx, (B, nc_x, H, W), jnp.float32)
    params = init_params(kp, nc_g, nc_x, nc_hidden)

    out = jax.block_until_ready(attention_gate(g, x, params))

    ref = _reference(g, x, params)
    assert out.shape == (B, nc_x, H, W)
    assert jnp.allclose(out, ref, atol=1e-5, rtol=1e-5)

    print("KERNEL_OK")
</pallas_src>

<mosaic_0001>
module attributes {stable_mosaic.version = 11 : i64} {
  func.func @kernel(%arg0: i32, %arg1: i32, %arg2: memref<1x4x256xf32, #tpu.memory_space<vmem>>, %arg3: memref<1x4x256xf32, #tpu.memory_space<vmem>>, %arg4: memref<32x11xf32, #tpu.memory_space<vmem>>, %arg5: memref<1x4x256xf32, #tpu.memory_space<vmem>>) attributes {dimension_semantics = [#tpu.dimension_semantics<parallel>, #tpu.dimension_semantics<parallel>], iteration_bounds = array<i64: 2, 1>, scalar_prefetch = 0 : i64, scratch_operands = 0 : i64, tpu.core_type = #tpu.core_type<tc>, window_params = [{transform_indices = @transform_0, window_bounds = array<i64: 1, 4, 256>}, {transform_indices = @transform_1, window_bounds = array<i64: 1, 4, 256>}, {pipeline_mode = #tpu.pipeline_mode<synchronous>, transform_indices = @transform_2, window_bounds = array<i64: 32, 11>}, {transform_indices = @transform_3, window_bounds = array<i64: 1, 4, 256>}]} {
    %c0 = arith.constant 0 : index
    %c0_0 = arith.constant 0 : index
    %0 = vector.load %arg4[%c0, %c0_0] : memref<32x11xf32, #tpu.memory_space<vmem>>, vector<32x4xf32>
    %c0_1 = arith.constant 0 : index
    %c4 = arith.constant 4 : index
    %1 = vector.load %arg4[%c0_1, %c4] : memref<32x11xf32, #tpu.memory_space<vmem>>, vector<32x4xf32>
    %c0_2 = arith.constant 0 : index
    %c8 = arith.constant 8 : index
    %2 = vector.load %arg4[%c0_2, %c8] : memref<32x11xf32, #tpu.memory_space<vmem>>, vector<32x1xf32>
    %c0_3 = arith.constant 0 : index
    %c9 = arith.constant 9 : index
    %3 = vector.load %arg4[%c0_3, %c9] : memref<32x11xf32, #tpu.memory_space<vmem>>, vector<32x1xf32>
    %c0_4 = arith.constant 0 : index
    %c10 = arith.constant 10 : index
    %4 = vector.load %arg4[%c0_4, %c10] : memref<32x11xf32, #tpu.memory_space<vmem>>, vector<1x1xf32>
    %c0_5 = arith.constant 0 : index
    %c0_6 = arith.constant 0 : index
    %c0_7 = arith.constant 0 : index
    %5 = vector.load %arg2[%c0_5, %c0_6, %c0_7] : memref<1x4x256xf32, #tpu.memory_space<vmem>>, vector<1x4x256xf32>
    %6 = vector.shape_cast %5 : vector<1x4x256xf32> to vector<4x256xf32>
    %c0_8 = arith.constant 0 : index
    %c0_9 = arith.constant 0 : index
    %c0_10 = arith.constant 0 : index
    %7 = vector.load %arg3[%c0_8, %c0_9, %c0_10] : memref<1x4x256xf32, #tpu.memory_space<vmem>>, vector<1x4x256xf32>
    %8 = vector.shape_cast %7 : vector<1x4x256xf32> to vector<4x256xf32>
    %cst = arith.constant dense<0.000000e+00> : vector<32x256xf32>
    %9 = tpu.matmul %0, %6, %cst {dimension_numbers = #tpu.dot_dimension_numbers<[1], [0], [0], [1], [0, 0, 1, 1], [], []>} : vector<32x4xf32>, vector<4x256xf32>, vector<32x256xf32> -> vector<32x256xf32>
    %cst_11 = arith.constant dense<0.000000e+00> : vector<32x256xf32>
    %10 = tpu.matmul %1, %8, %cst_11 {dimension_numbers = #tpu.dot_dimension_numbers<[1], [0], [0], [1], [0, 0, 1, 1], [], []>} : vector<32x4xf32>, vector<4x256xf32>, vector<32x256xf32> -> vector<32x256xf32>
    %11 = arith.addf %9, %10 : vector<32x256xf32>
    %12 = vector.broadcast %2 : vector<32x1xf32> to vector<32x256xf32>
    %13 = arith.addf %11, %12 : vector<32x256xf32>
    %cst_12 = arith.constant 0.000000e+00 : f32
    %14 = vector.broadcast %cst_12 : f32 to vector<32x256xf32>
    %15 = arith.maximumf %13, %14 : vector<32x256xf32>
    %16 = vector.broadcast %3 : vector<32x1xf32> to vector<32x256xf32>
    %17 = arith.mulf %15, %16 : vector<32x256xf32>
    %cst_13 = arith.constant dense<0.000000e+00> : vector<256xf32>
    %18 = vector.multi_reduction <add>, %17, %cst_13 [0] : vector<32x256xf32> to vector<256xf32>
    %19 = vector.shape_cast %18 : vector<256xf32> to vector<1x256xf32>
    %20 = vector.broadcast %4 : vector<1x1xf32> to vector<1x256xf32>
    %21 = arith.addf %19, %20 : vector<1x256xf32>
    %22 = arith.negf %21 : vector<1x256xf32>
    %23 = math.exp %22 : vector<1x256xf32>
    %cst_14 = arith.constant 1.000000e+00 : f32
    %24 = vector.broadcast %cst_14 : f32 to vector<1x256xf32>
    %25 = arith.addf %24, %23 : vector<1x256xf32>
    %26 = arith.divf %24, %25 : vector<1x256xf32>
    %27 = vector.broadcast %26 : vector<1x256xf32> to vector<4x256xf32>
    %28 = arith.mulf %8, %27 : vector<4x256xf32>
    %c0_15 = arith.constant 0 : index
    %c0_16 = arith.constant 0 : index
    %c0_17 = arith.constant 0 : index
    %29 = vector.load %arg5[%c0_15, %c0_16, %c0_17] : memref<1x4x256xf32, #tpu.memory_space<vmem>>, vector<1x4x256xf32>
    %30 = vector.shape_cast %29 : vector<1x4x256xf32> to vector<4x256xf32>
    %31 = vector.shape_cast %28 : vector<4x256xf32> to vector<1x4x256xf32>
    tpu.vector_store %arg5[%c0_15, %c0_16, %c0_17], %31 {strides = array<i32>} : memref<1x4x256xf32, #tpu.memory_space<vmem>>, vector<1x4x256xf32>,
    return
  }
  func.func @transform_0(%arg0: i32, %arg1: i32) -> (i32, i32, i32) {
    %c0_i32 = arith.constant 0 : i32
    %c0_i32_0 = arith.constant 0 : i32
    return %arg0, %c0_i32, %arg1 : i32, i32, i32
  }
  func.func @transform_1(%arg0: i32, %arg1: i32) -> (i32, i32, i32) {
    %c0_i32 = arith.constant 0 : i32
    %c0_i32_0 = arith.constant 0 : i32
    return %arg0, %c0_i32, %arg1 : i32, i32, i32
  }
  func.func @transform_2(%arg0: i32, %arg1: i32) -> (i32, i32) {
    %c0_i32 = arith.constant 0 : i32
    %c0_i32_0 = arith.constant 0 : i32
    %c0_i32_1 = arith.constant 0 : i32
    return %c0_i32, %c0_i32_0 : i32, i32
  }
  func.func @transform_3(%arg0: i32, %arg1: i32) -> (i32, i32, i32) {
    %c0_i32 = arith.constant 0 : i32
    %c0_i32_0 = arith.constant 0 : i32
    return %arg0, %c0_i32, %arg1 : i32, i32, i32
  }
}

</mosaic_0001>

<llo_original>
// kernel: tpu_custom_call.1
$region0: #{tpu_custom_call.1}
  #allocation0 [shape = 'u32[]', space=smem, size = 0x4, offset = 0x4, fixed_abs, tag = 'smem constant byte address 0x4 - core index']
  #allocation1 [shape = 'u32[144,128]{1,0:T(1,128)}', space=vmem, size = 0x12000, scoped, tag = 'internal scratch']
  %s0 = inlined_call_operand.vmem [shape: f32[2,4,256], index: 0, kind: input, shape index: {}]
  %s1 = inlined_call_operand.vmem [shape: f32[2,4,256], index: 1, kind: input, shape index: {}]
  %s2 = inlined_call_operand.vmem [shape: f32[32,11], index: 2, kind: input, shape index: {}]
  %s3 = inlined_call_operand.hbm [shape: f32[2,4,256], index: 3, kind: output, shape index: {}]
  %s4 = sld [smem:[#allocation0]]
  $region45: #{tpu_custom_call.1} parent=0
    _
  %s6 = ssub.s32 1, %s4
  %s7 = scalar_select 0, %s6, %s4
  $region1: #{tpu_custom_call.1} parent=0
    #allocation2 [shape = 'u8[8192]{0}', space=vmem, size = 0x2000, scoped, tag = 'output window, operand 0']
    #allocation3 [shape = 's32[2]{0}', space=sflag, size = 0x8, scoped, tag = 'scoped memory for tpu_custom_call.1']
    %8 = vsyncpa [#allocation3], 0
    %s9 = scalar_lea.sflag [#allocation3], 1
    %10 = vsyncpa %s9, 0
    loop: start=0, step=1, limit=4
    $region2: #{tpu_custom_call.1} parent=1 // loop_pre_header
      _
    $region3: #{tpu_custom_call.1} parent=1 // loop_header
      %s12 = sphi 0, %s16
      %p13 = scmp.ge.s32.totalorder %s12, 4
      %s19 = sphi 0, %s31
      %s20 = sphi 0, %s27
      %s21 = sphi 0, %s19
      %s22 = sphi 0, %s20
      %s23 = sphi 0, %s21
      %s24 = sphi 0, %s22
      %s36 = sphi 0, %s38
      %s39 = sphi 0, %s36
      %s40 = sphi 0, %s39
      %s56 = sphi 0, %s40
      %s64 = sphi 0, %s66
      %s67 = sphi 0, %s64
      %s68 = sphi 0, %s67
      %s84 = sphi 0, %s68
      %s88 = sphi 0, %s88
      %s90 = sphi 0, %s88
      %s91 = sphi 0, %s90
      %s105 = sphi 0, %s91
      %s113 = sphi 0, %s115
      %s116 = sphi 0, %s113
      %s117 = sphi 0, %s116
      %s133 = sphi 0, %s117
    $region4: #{tpu_custom_call.1} parent=1 // loop_header_branch
      %15 = sbr.rel (%p13) target = $region8
    $region5: #{tpu_custom_call.1} parent=1 // loop_body
      %s17 = ssub.s32 %s12, 1
      %s18 = ssub.s32 %s12, 2
      %s25 = sadd.s32 1, %s20
      %p26 = scmp.ge.s32.totalorder %s25, 1
      %s27 = scalar_select %p26, 0, %s25
      %s28 = sadd.s32 1, %s19
      %s29 = scalar_select %p26, %s28, %s19
      %p30 = scmp.ge.s32.totalorder %s29, 2
      %s31 = scalar_select %p30, 0, %s29
      %s32 = ssub.s32 %s19, %s31
      %s33 = ssub.s32 %s20, %s27
      %s34 = sor.u32 %s32, %s33
      %p35 = scmp.eq.s32.totalorder %s34, 0
      %s37 = sadd.s32 %s36, 1
      %s38 = scalar_select %p35, %s36, %s37
      %p41 = pneg %p35
      %p42 = scmp.eq.s32.totalorder %s12, 1
      %p43 = por %p41, %p42
      %p44 = scmp.ne.s32.totalorder %s36, %s39
      %p45 = scmp.eq.s32.totalorder %s12, 0
      %p46 = por %p44, %p45
      %p47 = scmp.ne.s32.totalorder %s36, %s39
      %p48 = scmp.eq.s32.totalorder %s17, 1
      %p49 = por %p47, %p48
      %p50 = scmp.ne.s32.totalorder %s39, %s40
      %p51 = scmp.eq.s32.totalorder %s17, 0
      %p52 = por %p50, %p51
      %p53 = scmp.ne.s32.totalorder %s39, %s40
      %p54 = scmp.eq.s32.totalorder %s18, 1
      %p55 = por %p53, %p54
      %p57 = scmp.ne.s32.totalorder %s40, %s56
      %p58 = scmp.eq.s32.totalorder %s18, 0
      %p59 = por %p57, %p58
      %s60 = ssub.s32 %s19, %s31
      %s61 = ssub.s32 %s20, %s27
      %s62 = sor.u32 %s60, %s61
      %p63 = scmp.eq.s32.totalorder %s62, 0
      %s65 = sadd.s32 %s64, 1
      %s66 = scalar_select %p63, %s64, %s65
      %p69 = pneg %p63
      %p70 = scmp.eq.s32.totalorder %s12, 1
      %p71 = por %p69, %p70
      %p72 = scmp.ne.s32.totalorder %s64, %s67
      %p73 = scmp.eq.s32.totalorder %s12, 0
      %p74 = por %p72, %p73
      %p75 = scmp.ne.s32.totalorder %s64, %s67
      %p76 = scmp.eq.s32.totalorder %s17, 1
      %p77 = por %p75, %p76
      %p78 = scmp.ne.s32.totalorder %s67, %s68
      %p79 = scmp.eq.s32.totalorder %s17, 0
      %p80 = por %p78, %p79
      %p81 = scmp.ne.s32.totalorder %s67, %s68
      %p82 = scmp.eq.s32.totalorder %s18, 1
      %p83 = por %p81, %p82
      %p85 = scmp.ne.s32.totalorder %s68, %s84
      %p86 = scmp.eq.s32.totalorder %s18, 0
      %p87 = por %p85, %p86
      %s89 = sadd.s32 %s88, 1
      %p92 = scmp.eq.s32.totalorder %s12, 1
      %p93 = scmp.ne.s32.totalorder %s88, %s90
      %p94 = scmp.eq.s32.totalorder %s12, 0
      %p95 = por %p93, %p94
      %p96 = scmp.ne.s32.totalorder %s88, %s90
      %p97 = scmp.eq.s32.totalorder %s17, 1
      %p98 = por %p96, %p97
      %p99 = scmp.ne.s32.totalorder %s90, %s91
      %p100 = scmp.eq.s32.totalorder %s17, 0
      %p101 = por %p99, %p100
      %p102 = scmp.ne.s32.totalorder %s90, %s91
      %p103 = scmp.eq.s32.totalorder %s18, 1
      %p104 = por %p102, %p103
      %p106 = scmp.ne.s32.totalorder %s91, %s105
      %p107 = scmp.eq.s32.totalorder %s18, 0
      %p108 = por %p106, %p107
      %s109 = ssub.s32 %s19, %s31
      %s110 = ssub.s32 %s20, %s27
      %s111 = sor.u32 %s109, %s110
      %p112 = scmp.eq.s32.totalorder %s111, 0
      %s114 = sadd.s32 %s113, 1
      %s115 = scalar_select %p112, %s113, %s114
      %p118 = pneg %p112
      %p119 = scmp.eq.s32.totalorder %s12, 1
      %p120 = por %p118, %p119
      %p121 = scmp.ne.s32.totalorder %s113, %s116
      %p122 = scmp.eq.s32.totalorder %s12, 0
      %p123 = por %p121, %p122
      %p124 = scmp.ne.s32.totalorder %s113, %s116
      %p125 = scmp.eq.s32.totalorder %s17, 1
      %p126 = por %p124, %p125
      %p127 = scmp.ne.s32.totalorder %s116, %s117
      %p128 = scmp.eq.s32.totalorder %s17, 0
      %p129 = por %p127, %p128
      %p130 = scmp.ne.s32.totalorder %s116, %s117
      %p131 = scmp.eq.s32.totalorder %s18, 1
      %p132 = por %p130, %p131
      %p134 = scmp.ne.s32.totalorder %s117, %s133
      %p135 = scmp.eq.s32.totalorder %s18, 0
      %p136 = por %p134, %p135
      %p137 = scmp.le.s32.totalorder 1, %s12
      %p138 = scmp.lt.s32.totalorder %s12, 3
      %p139 = pnand %p137, %p138
      %p140 = pneg %p139
      // Predicated region
      $region9: #{tpu_custom_call.1} parent=5 // pred_check
        _
      $region10: #{tpu_custom_call.1} parent=5 // pred_check_branch
        %142 = sbr.rel (%p139) target = $region12
      $region11: #{tpu_custom_call.1} parent=5 // pred_region
        %s143 = ssub.s32 %s12, 1
        // Predicated region
        $region13: #{tpu_custom_call.1} parent=11 // pred_check
          %p144 = pneg %p101
        $region14: #{tpu_custom_call.1} parent=11 // pred_check_branch
          %146 = sbr.rel (%p144) target = $region16
        $region15: #{tpu_custom_call.1} parent=11 // pred_region
          _
        $region16: #{tpu_custom_call.1} parent=11 // pred_fallthru
          _
      $region12: #{tpu_custom_call.1} parent=5 // pred_fallthru
        _
      %p147 = scmp.lt.s32.totalorder %s12, 2
      // Predicated region
      $region17: #{tpu_custom_call.1} parent=5 // pred_check
        %p148 = pneg %p147
      $region18: #{tpu_custom_call.1} parent=5 // pred_check_branch
        %150 = sbr.rel (%p148) target = $region20
      $region19: #{tpu_custom_call.1} parent=5 // pred_region
        // Predicated region
        $region21: #{tpu_custom_call.1} parent=19 // pred_check
          %p151 = pneg %p46
        $region22: #{tpu_custom_call.1} parent=19 // pred_check_branch
          %153 = sbr.rel (%p151) target = $region24
        $region23: #{tpu_custom_call.1} parent=19 // pred_region
          %s154 = smul.u32 2, %s20
          %p155 = scmp.lt.s32.totalorder %s19, 1
          %s156 = scalar_select %p155, %s19, 1
          %p157 = scmp.lt.s32.totalorder %s154, 1
          %s158 = scalar_select %p157, %s154, 1
          %s159 = smul.addr %s156, 2
          %s160 = sadd.s32 %s158, %s159
          %s161 = smul.addr %s160, 4
          %s162 = scalar_lea.vmem %s0, %s161
          %s163 = smul.u32 2, %s20
        $region24: #{tpu_custom_call.1} parent=19 // pred_fallthru
          _
        // Predicated region
        $region25: #{tpu_custom_call.1} parent=19 // pred_check
          %p164 = pneg %p74
        $region26: #{tpu_custom_call.1} parent=19 // pred_check_branch
          %166 = sbr.rel (%p164) target = $region28
        $region27: #{tpu_custom_call.1} parent=19 // pred_region
          %s167 = smul.u32 2, %s20
          %p168 = scmp.lt.s32.totalorder %s19, 1
          %s169 = scalar_select %p168, %s19, 1
          %p170 = scmp.lt.s32.totalorder %s167, 1
          %s171 = scalar_select %p170, %s167, 1
          %s172 = smul.addr %s169, 2
          %s173 = sadd.s32 %s171, %s172
          %s174 = smul.addr %s173, 4
          %s175 = scalar_lea.vmem %s1, %s174
          %s176 = smul.u32 2, %s20
        $region28: #{tpu_custom_call.1} parent=19 // pred_fallthru
          _
      $region20: #{tpu_custom_call.1} parent=5 // pred_fallthru
        _
      %p177 = scmp.le.s32.totalorder 1, %s12
      %p178 = scmp.lt.s32.totalorder %s12, 3
      %p179 = pnand %p177, %p178
      %p180 = pneg %p179
      // Predicated region
      $region29: #{tpu_custom_call.1} parent=5 // pred_check
        _
      $region30: #{tpu_custom_call.1} parent=5 // pred_check_branch
        %182 = sbr.rel (%p179) target = $region32
      $region31: #{tpu_custom_call.1} parent=5 // pred_region
        %s183 = ssub.s32 %s12, 1
        %s184 = smul.u32 2, %s22
        %p185 = scmp.lt.s32.totalorder %s21, 1
        %s186 = scalar_select %p185, %s21, 1
        %p187 = scmp.lt.s32.totalorder %s184, 1
        %s188 = scalar_select %p187, %s184, 1
        %s189 = smul.addr %s186, 2
        %s190 = sadd.s32 %s188, %s189
        %s191 = smul.addr %s190, 4
        %s192 = scalar_lea.vmem %s0, %s191
        %p193 = pneg %p52
        %p194 = pneg %p49
        %s195 = smul.u32 2, %s22
        %p196 = scmp.lt.s32.totalorder %s21, 1
        %s197 = scalar_select %p196, %s21, 1
        %p198 = scmp.lt.s32.totalorder %s195, 1
        %s199 = scalar_select %p198, %s195, 1
        %s200 = smul.addr %s197, 2
        %s201 = sadd.s32 %s199, %s200
        %s202 = smul.addr %s201, 4
        %s203 = scalar_lea.vmem %s1, %s202
        %p204 = pneg %p80
        %p205 = pneg %p77
        %p206 = pneg %p101
        %p207 = pneg %p98
        %p208 = pneg %p129
        %p209 = pneg %p126
        %s210 = sand.u32 %s116, 1
        %s211 = scalar_lea.sflag [#allocation3], %s210
        %s212 = sand.u32 %s116, 1
        %s213 = smul.addr %s212, 8
        %s214 = scalar_lea.vmem [#allocation2], %s213
        %s215 = smul.u32 2, %s22
        %p216 = scmp.lt.s32.totalorder %s21, 1
        %s217 = scalar_select %p216, %s21, 1
        %p218 = scmp.lt.s32.totalorder %s215, 1
        %s219 = scalar_select %p218, %s215, 1
        %s220 = smul.addr %s217, 2
        %s221 = sadd.s32 %s219, %s220
        %s222 = smul.addr %s221, 4
        %s223 = scalar_lea.vmem %s0, %s222
        %s224 = smul.u32 2, %s22
        %s225 = smul.u32 2, %s22
        %p226 = scmp.lt.s32.totalorder %s21, 1
        %s227 = scalar_select %p226, %s21, 1
        %p228 = scmp.lt.s32.totalorder %s225, 1
        %s229 = scalar_select %p228, %s225, 1
        %s230 = smul.addr %s227, 2
        %s231 = sadd.s32 %s229, %s230
        %s232 = smul.addr %s231, 4
        %s233 = scalar_lea.vmem %s1, %s232
        %s234 = smul.u32 2, %s22
        %s235 = smul.u32 2, %s22
        %v236 = vld [vmem:[%s2] sm:$0xff]
        %v237 = vld [vmem:[%s2 + $0x8] sm:$0xff]
        %v238 = vld [vmem:[%s2 + $0x10] sm:$0xff]
        %v239 = vld [vmem:[%s2 + $0x18] sm:$0xff]
        %v240 = vld [vmem:[%s2] sm:$0x1]
        %v241 = vld [vmem:[%s223] sm:$0xff]
        %v242 = vld [vmem:[%s233] sm:$0xff]
        %247 = vrot.lane.b32.xlu0 %v236, 124
        %v248 = vpop.permute.xlu0 %247
        %249 = vrot.lane.b32.xlu0 %v237, 124
        %v250 = vpop.permute.xlu0 %249
        %251 = vrot.lane.b32.xlu0 %v238, 124
        %v252 = vpop.permute.xlu0 %251
        %253 = vrot.lane.b32.xlu0 %v239, 124
        %v254 = vpop.permute.xlu0 %253
        %v256 = vcombine.high %v242, %v242
        %vm257 = vcmask 31744
        %v258 = vsel %vm257, %v248, 0
        %v260 = vsel %vm257, %v250, 0
        %v262 = vsel %vm257, %v252, 0
        %v264 = vsel %vm257, %v254, 0
        %vm266 = vcmask 1043456
        %v267 = vsel %vm266, %v242, 0
        %v269 = vsel %vm266, %v256, 0
        %271 = vmatprep.subr.mxu0 %v269
        %272 = vmatpush1.msra.mxu0 %v267
        %273 = vmatprep.subr.mxu0 0.0
        %274 = vmatpush1.msra.mxu0 0.0
        %275 = vmatprep.subr.mxu0 0.0
        %276 = vmatpush1.msra.mxu0 0.0
        %277 = vmatprep.subr.mxu0 0.0
        %278 = vmatpush1.msra.mxu0 0.0
        %279 = vmatprep.subr.mxu0 0.0
        %280 = vmatpush1.msra.mxu0 0.0
        %281 = vmatprep.subr.mxu0 0.0
        %282 = vmatpush1.msra.mxu0 0.0
        %283 = vmatprep.subr.mxu0 0.0
        %284 = vmatpush1.msra.mxu0 0.0
        %285 = vmatprep.subr.mxu0 0.0
        %286 = vmatpush1.msra.mxu0 0.0
        %287 = vmatprep.subr.mxu0 0.0
        %288 = vmatpush1.msra.mxu0 0.0
        %289 = vmatprep.subr.mxu0 0.0
        %290 = vmatpush1.msra.mxu0 0.0
        %291 = vmatprep.subr.mxu0 0.0
        %292 = vmatpush1.msra.mxu0 0.0
        %293 = vmatprep.subr.mxu0 0.0
        %294 = vmatpush1.msra.mxu0 0.0
        %295 = vmatprep.subr.mxu0 0.0
        %296 = vmatpush1.msra.mxu0 0.0
        %297 = vmatprep.subr.mxu0 0.0
        %298 = vmatpush1.msra.mxu0 0.0
        %299 = vmatprep.subr.mxu0 0.0
        %300 = vmatpush1.msra.mxu0 0.0
        %301 = vmatprep.subr.mxu0 0.0
        %302 = vmatpush1.msra.mxu0 0.0
        %303 = vmatprep.subr.mxu0 0.0
        %304 = vmatpush1.msra.mxu0 0.0
        %305 = vmatprep.subr.mxu0 0.0
        %306 = vmatpush1.msra.mxu0 0.0
        %307 = vmatprep.subr.mxu0 0.0
        %308 = vmatpush1.msra.mxu0 0.0
        %309 = vmatprep.subr.mxu0 0.0
        %310 = vmatpush1.msra.mxu0 0.0
        %311 = vmatprep.subr.mxu0 0.0
        %312 = vmatpush1.msra.mxu0 0.0
        %313 = vmatprep.subr.mxu0 0.0
        %314 = vmatpush1.msra.mxu0 0.0
        %315 = vmatprep.subr.mxu0 0.0
        %316 = vmatpush1.msra.mxu0 0.0
        %317 = vmatprep.subr.mxu0 0.0
        %318 = vmatpush1.msra.mxu0 0.0
        %319 = vmatprep.subr.mxu0 0.0
        %320 = vmatpush1.msra.mxu0 0.0
        %321 = vmatprep.subr.mxu0 0.0
        %322 = vmatpush1.msra.mxu0 0.0
        %323 = vmatprep.subr.mxu0 0.0
        %324 = vmatpush1.msra.mxu0 0.0
        %325 = vmatprep.subr.mxu0 0.0
        %326 = vmatpush1.msra.mxu0 0.0
        %327 = vmatprep.subr.mxu0 0.0
        %328 = vmatpush1.msra.mxu0 0.0
        %329 = vmatprep.subr.mxu0 0.0
        %330 = vmatpush1.msra.mxu0 0.0
        %331 = vmatprep.subr.mxu0 0.0
        %332 = vmatpush1.msra.mxu0 0.0
        %333 = vmatprep.subr.mxu0 0.0
        %334 = vmatpush1.msra.mxu0 0.0
        %335 = vmatprep.mubr.f32.mxu0 0.0
        %336 = vmatmul.mubr.f32.gmra.mrb[0].mxu0 %v258
        %v337 = vpop.f32.mrb[0].mxu0
        %v338 = vadd.f32 0.0, %v337
        %v339 = vpop.f32.mrb[0].mxu0
        %v340 = vadd.f32 0.0, %v339
        %341 = vmatprep.mubr.f32.mxu0 0.0
        %342 = vmatmul.mubr.f32.gmra.mrb[0].mxu0 %v260
        %v343 = vpop.f32.mrb[0].mxu0
        %v344 = vadd.f32 0.0, %v343
        %v345 = vpop.f32.mrb[0].mxu0
        %v346 = vadd.f32 0.0, %v345
        %347 = vmatprep.mubr.f32.mxu0 0.0
        %348 = vmatmul.mubr.f32.gmra.mrb[0].mxu0 %v262
        %v349 = vpop.f32.mrb[0].mxu0
        %v350 = vadd.f32 0.0, %v349
        %v351 = vpop.f32.mrb[0].mxu0
        %v352 = vadd.f32 0.0, %v351
        %353 = vmatprep.mubr.f32.mxu0 0.0
        %354 = vmatmul.mubr.f32.gmra.mrb[0].mxu0 %v264
        %v355 = vpop.f32.mrb[0].mxu0
        %v356 = vadd.f32 0.0, %v355
        %v357 = vpop.f32.mrb[0].mxu0
        %v358 = vadd.f32 0.0, %v357
        %359 = vdwg.mxu0
        %v361 = vcombine.high %v241, %v241
        %v362 = vsel %vm257, %v236, 0
        %v364 = vsel %vm257, %v237, 0
        %v366 = vsel %vm257, %v238, 0
        %v368 = vsel %vm257, %v239, 0
        %v370 = vsel %vm266, %v241, 0
        %v372 = vsel %vm266, %v361, 0
        %374 = vmatprep.subr.mxu0 %v372
        %375 = vmatpush1.msra.mxu0 %v370
        %376 = vmatprep.subr.mxu0 0.0
        %377 = vmatpush1.msra.mxu0 0.0
        %378 = vmatprep.subr.mxu0 0.0
        %379 = vmatpush1.msra.mxu0 0.0
        %380 = vmatprep.subr.mxu0 0.0
        %381 = vmatpush1.msra.mxu0 0.0
        %382 = vmatprep.subr.mxu0 0.0
        %383 = vmatpush1.msra.mxu0 0.0
        %384 = vmatprep.subr.mxu0 0.0
        %385 = vmatpush1.msra.mxu0 0.0
        %386 = vmatprep.subr.mxu0 0.0
        %387 = vmatpush1.msra.mxu0 0.0
        %388 = vmatprep.subr.mxu0 0.0
        %389 = vmatpush1.msra.mxu0 0.0
        %390 = vmatprep.subr.mxu0 0.0
        %391 = vmatpush1.msra.mxu0 0.0
        %392 = vmatprep.subr.mxu0 0.0
        %393 = vmatpush1.msra.mxu0 0.0
        %394 = vmatprep.subr.mxu0 0.0
        %395 = vmatpush1.msra.mxu0 0.0
        %396 = vmatprep.subr.mxu0 0.0
        %397 = vmatpush1.msra.mxu0 0.0
        %398 = vmatprep.subr.mxu0 0.0
        %399 = vmatpush1.msra.mxu0 0.0
        %400 = vmatprep.subr.mxu0 0.0
        %401 = vmatpush1.msra.mxu0 0.0
        %402 = vmatprep.subr.mxu0 0.0
        %403 = vmatpush1.msra.mxu0 0.0
        %404 = vmatprep.subr.mxu0 0.0
        %405 = vmatpush1.msra.mxu0 0.0
        %406 = vmatprep.subr.mxu0 0.0
        %407 = vmatpush1.msra.mxu0 0.0
        %408 = vmatprep.subr.mxu0 0.0
        %409 = vmatpush1.msra.mxu0 0.0
        %410 = vmatprep.subr.mxu0 0.0
        %411 = vmatpush1.msra.mxu0 0.0
        %412 = vmatprep.subr.mxu0 0.0
        %413 = vmatpush1.msra.mxu0 0.0
        %414 = vmatprep.subr.mxu0 0.0
        %415 = vmatpush1.msra.mxu0 0.0
        %416 = vmatprep.subr.mxu0 0.0
        %417 = vmatpush1.msra.mxu0 0.0
        %418 = vmatprep.subr.mxu0 0.0
        %419 = vmatpush1.msra.mxu0 0.0
        %420 = vmatprep.subr.mxu0 0.0
        %421 = vmatpush1.msra.mxu0 0.0
        %422 = vmatprep.subr.mxu0 0.0
        %423 = vmatpush1.msra.mxu0 0.0
        %424 = vmatprep.subr.mxu0 0.0
        %425 = vmatpush1.msra.mxu0 0.0
        %426 = vmatprep.subr.mxu0 0.0
        %427 = vmatpush1.msra.mxu0 0.0
        %428 = vmatprep.subr.mxu0 0.0
        %429 = vmatpush1.msra.mxu0 0.0
        %430 = vmatprep.subr.mxu0 0.0
        %431 = vmatpush1.msra.mxu0 0.0
        %432 = vmatprep.subr.mxu0 0.0
        %433 = vmatpush1.msra.mxu0 0.0
        %434 = vmatprep.subr.mxu0 0.0
        %435 = vmatpush1.msra.mxu0 0.0
        %436 = vmatprep.subr.mxu0 0.0
        %437 = vmatpush1.msra.mxu0 0.0
        %438 = vmatprep.mubr.f32.mxu0 0.0
        %439 = vmatmul.mubr.f32.gmra.mrb[0].mxu0 %v362
        %v440 = vpop.f32.mrb[0].mxu0
        %v441 = vadd.f32 %v338, %v440
        %v442 = vpop.f32.mrb[0].mxu0
        %v443 = vadd.f32 %v340, %v442
        %444 = vmatprep.mubr.f32.mxu0 0.0
        %445 = vmatmul.mubr.f32.gmra.mrb[0].mxu0 %v364
        %v446 = vpop.f32.mrb[0].mxu0
        %v447 = vadd.f32 %v344, %v446
        %v448 = vpop.f32.mrb[0].mxu0
        %v449 = vadd.f32 %v346, %v448
        %450 = vmatprep.mubr.f32.mxu0 0.0
        %451 = vmatmul.mubr.f32.gmra.mrb[0].mxu0 %v366
        %v452 = vpop.f32.mrb[0].mxu0
        %v453 = vadd.f32 %v350, %v452
        %v454 = vpop.f32.mrb[0].mxu0
        %v455 = vadd.f32 %v352, %v454
        %456 = vmatprep.mubr.f32.mxu0 0.0
        %457 = vmatmul.mubr.f32.gmra.mrb[0].mxu0 %v368
        %v458 = vpop.f32.mrb[0].mxu0
        %v459 = vadd.f32 %v356, %v458
        %v460 = vpop.f32.mrb[0].mxu0
        %v461 = vadd.f32 %v358, %v460
        %462 = vdwg.mxu0
        %463 = vset.pattern.permute.xlu0 8
        %464 = vperm.xlu0 %463, %v236
        %v465 = vpop.permute.xlu0 %464
        %467 = vset.pattern.permute.xlu0 8
        %468 = vperm.xlu0 %467, %v237
        %v469 = vpop.permute.xlu0 %468
        %471 = vset.pattern.permute.xlu0 8
        %472 = vperm.xlu0 %471, %v238
        %v473 = vpop.permute.xlu0 %472
        %475 = vset.pattern.permute.xlu0 8
        %476 = vperm.xlu0 %475, %v239
        %v477 = vpop.permute.xlu0 %476
        %v479 = vadd.f32 %v441, %v465
        %v480 = vadd.f32 %v443, %v465
        %v481 = vadd.f32 %v447, %v469
        %v482 = vadd.f32 %v449, %v469
        %v483 = vadd.f32 %v453, %v473
        %v484 = vadd.f32 %v455, %v473
        %v485 = vadd.f32 %v459, %v477
        %v486 = vadd.f32 %v461, %v477
        %v487 = vmax.f32 %v479, 0.0
        %v488 = vmax.f32 %v480, 0.0
        %v489 = vmax.f32 %v481, 0.0
        %v490 = vmax.f32 %v482, 0.0
        %v491 = vmax.f32 %v483, 0.0
        %v492 = vmax.f32 %v484, 0.0
        %v493 = vmax.f32 %v485, 0.0
        %v494 = vmax.f32 %v486, 0.0
        %495 = vset.pattern.permute.xlu0 9
        %496 = vperm.xlu0 %495, %v236
        %v497 = vpop.permute.xlu0 %496
        %499 = vset.pattern.permute.xlu0 9
        %500 = vperm.xlu0 %499, %v237
        %v501 = vpop.permute.xlu0 %500
        %503 = vset.pattern.permute.xlu0 9
        %504 = vperm.xlu0 %503, %v238
        %v505 = vpop.permute.xlu0 %504
        %507 = vset.pattern.permute.xlu0 9
        %508 = vperm.xlu0 %507, %v239
        %v509 = vpop.permute.xlu0 %508
        %v511 = vmul.f32 %v487, %v497
        %v512 = vmul.f32 %v488, %v497
        %v513 = vmul.f32 %v489, %v501
        %v514 = vmul.f32 %v490, %v501
        %v515 = vmul.f32 %v491, %v505
        %v516 = vmul.f32 %v492, %v505
        %v517 = vmul.f32 %v493, %v509
        %v518 = vmul.f32 %v494, %v509
        %v519 = vadd.f32 %v511, %v513
        %v520 = vadd.f32 %v519, %v515
        %v521 = vadd.f32 %v520, %v517
        %v522 = vrot.slane %v521, 4
        %v523 = vadd.f32 %v521, %v522
        %v524 = vrot.slane %v523, 2
        %v525 = vadd.f32 %v523, %v524
        %v526 = vrot.slane %v525, 1
        %v527 = vadd.f32 %v525, %v526
        %v528 = vadd.f32 %v512, %v514
        %v529 = vadd.f32 %v528, %v516
        %v530 = vadd.f32 %v529, %v518
        %v531 = vrot.slane %v530, 4
        %v532 = vadd.f32 %v530, %v531
        %v533 = vrot.slane %v532, 2
        %v534 = vadd.f32 %v532, %v533
        %v535 = vrot.slane %v534, 1
        %v536 = vadd.f32 %v534, %v535
        %538 = vset.pattern.permute.xlu0 10
        %539 = vperm.xlu0 %538, %v240
        %v540 = vpop.permute.xlu0 %539
        %v542 = vadd.f32 %v527, %v540
        %v543 = vadd.f32 %v536, %v540
        %v544 = vxor.u32 %v542, 2147483648
        %v545 = vxor.u32 %v543, 2147483648
        %v546 = vmul.f32 %v544, 1.442695
        %v547 = vpow.pop %v546
        %v548 = vmul.f32 %v545, 1.442695
        %v549 = vpow.pop %v548
        %v550 = vadd.f32 %v547, 1.0
        %v551 = vadd.f32 %v549, 1.0
        %v552 = vrcp.pop %v550
        %v553 = vmul.f32 1.0, %v552
        %v554 = vrcp.pop %v551
        %v555 = vmul.f32 1.0, %v554
        %v556 = vlaneseq
        %v557 = vshrl.u32 %v556, 7
        %v558 = vsub.s32 0, %v557
        %v559 = vrot.slane %v553, %v558
        %v560 = vlaneseq
        %v561 = vshrl.u32 %v560, 7
        %v562 = vsub.s32 0, %v561
        %v563 = vrot.slane %v555, %v562
        %v566 = vcombine.low %v559, %v563
        %v568 = vmul.f32 %v242, %v566
        %569 = vst [vmem:[%s214] sm:$0xff] %v568
        %s570 = sand.u32 %s116, 1
        %s571 = scalar_lea.sflag [#allocation3], %s570
        %s572 = sand.u32 %s116, 1
        %s573 = smul.addr %s572, 8
        %s574 = scalar_lea.vmem [#allocation2], %s573
        // Predicated region
        $region33: #{tpu_custom_call.1} parent=31 // pred_check
          %p575 = pneg %p126
        $region34: #{tpu_custom_call.1} parent=31 // pred_check_branch
          %577 = sbr.rel (%p575) target = $region36
        $region35: #{tpu_custom_call.1} parent=31 // pred_region
          %s578 = smul.u32 2, %s22
          %s580 = ssub.s32 128, 128
          %581 = vsyncadd %s571, %s580
          %s582 = smul.addr %s21, 2
          %s583 = sadd.s32 %s578, %s582
          %s584 = smul.addr %s583, 64
          %s585 = scalar_lea.hbm %s3, %s584
          %s587 = sshll.u32 %s574, 4
          %s588 = int_to_ptr.vmem [resolvable:$true] %s587
          %590 = dma.vmem_to_hbm [thread:$0]  %s588, 128, %s585, %s571
        $region36: #{tpu_custom_call.1} parent=31 // pred_fallthru
          _
      $region32: #{tpu_custom_call.1} parent=5 // pred_fallthru
        _
      %p591 = scmp.le.s32.totalorder 2, %s12
      // Predicated region
      $region37: #{tpu_custom_call.1} parent=5 // pred_check
        %p592 = pneg %p591
      $region38: #{tpu_custom_call.1} parent=5 // pred_check_branch
        %594 = sbr.rel (%p592) target = $region40
      $region39: #{tpu_custom_call.1} parent=5 // pred_region
        %s595 = ssub.s32 %s12, 2
        // Predicated region
        $region41: #{tpu_custom_call.1} parent=39 // pred_check
          %p596 = pneg %p132
        $region42: #{tpu_custom_call.1} parent=39 // pred_check_branch
          %598 = sbr.rel (%p596) target = $region44
        $region43: #{tpu_custom_call.1} parent=39 // pred_region
          %s599 = sand.u32 %s117, 1
          %s600 = scalar_lea.sflag [#allocation3], %s599
          %s601 = sand.u32 %s117, 1
          %s602 = smul.addr %s601, 8
          %s603 = scalar_lea.vmem [#allocation2], %s602
          %604 = dma.done %s600, 128
        $region44: #{tpu_custom_call.1} parent=39 // pred_fallthru
          _
      $region40: #{tpu_custom_call.1} parent=5 // pred_fallthru
        _
    $region6: #{tpu_custom_call.1} parent=1 // loop_footer
      %s16 = sadd.s32 1, %s12
    $region7: #{tpu_custom_call.1} parent=1 // loop_footer_branch
      %11 = sbr.rel target = $region3
    $region8: #{tpu_custom_call.1} parent=1 // loop_exit
      _
    %605 = vsyncpa [#allocation3], 1
    %s606 = scalar_lea.sflag [#allocation3], 1
    %607 = vsyncpa %s606, 1

</llo_original>
